<compile_context>
chip_gen: v7x
topology: tpu7x:2x2x1
jax: 0.10.0
libtpu: 0.0.40
codegen_flags: <defaults>
</compile_context>

<pallas_src>
import jax
import jax.numpy as jnp
from jax import lax
from jax.experimental import pallas as pl
from jax.experimental.pallas import tpu as pltpu


def gate_kernel(x_ref, w_ref, b_ref, o_ref):
    # x_ref: (tm, D_in); w_ref: (D_out, D_in) torch-Linear layout, VMEM-resident;
    # b_ref: (1, D_out). Contract on the last dim of both operands => x @ W.T on
    # the MXU with f32 accumulation; bias add on the VPU.
    acc = lax.dot_general(
        x_ref[...], w_ref[...],
        dimension_numbers=(((1,), (1,)), ((), ())),
        preferred_element_type=jnp.float32)
    o_ref[...] = (acc + b_ref[...]).astype(o_ref.dtype)


def gate_forward(x, weight, bias, *, compute_dtype=None, block_rows=512):
    """Pallas equivalent of GATE.forward: x.clone() @ weight.T + bias.

    x:      (B, D_in)
    weight: (D_out, D_in)  -- torch.nn.Linear layout, consumed as-is (no transpose pass)
    bias:   (D_out,)
    compute_dtype: optional MXU operand dtype (e.g. jnp.bfloat16); accumulation is f32.
    """
    B, D_in = x.shape
    D_out, D_in_w = weight.shape
    assert D_in == D_in_w, "weight must be (D_out, D_in)"

    x_in = x if compute_dtype is None else x.astype(compute_dtype)
    w_in = weight if compute_dtype is None else weight.astype(compute_dtype)
    b2 = bias.reshape(1, D_out).astype(jnp.float32)

    # Tile only the batch axis; a GATE-sized (D_out, D_in) weight easily fits VMEM.
    # TODO(synk): for large D (f32 weight approaching v7x's VMEM budget) switch to a
    # 3-axis (M, N, K) tiled grid with a VMEM f32 accumulator and pl.when bias add;
    # lane-density at D=32 would come from fusing several gate heads, which a single
    # GATE module does not expose.
    tm = max(8, min(B, block_rows))
    grid_m = pl.cdiv(B, tm)
    b_pad = grid_m * tm
    if b_pad != B:
        x_in = jnp.pad(x_in, ((0, b_pad - B), (0, 0)))

    # Explicit VMEM budget: double-buffered x/out tiles + resident weight + bias,
    # with headroom, clamped so the same tiling is safe on v7x (64 MiB physical).
    in_itemsize = jnp.dtype(x_in.dtype).itemsize
    out_itemsize = jnp.dtype(x.dtype).itemsize
    need = (2 * tm * D_in * in_itemsize
            + 2 * tm * D_out * out_itemsize
            + D_out * D_in * in_itemsize
            + D_out * 4)
    vmem_limit = int(min(max(4 * need, 16 << 20), 48 << 20))

    out = pl.pallas_call(
        gate_kernel,
        out_shape=jax.ShapeDtypeStruct((b_pad, D_out), x.dtype),
        grid=(grid_m,),
        in_specs=[
            pl.BlockSpec((tm, D_in), lambda i: (i, 0)),      # stream batch tiles
            pl.BlockSpec((D_out, D_in), lambda i: (0, 0)),   # weight: DMA once, resident
            pl.BlockSpec((1, D_out), lambda i: (0, 0)),      # bias: resident
        ],
        out_specs=pl.BlockSpec((tm, D_out), lambda i: (i, 0)),
        compiler_params=pltpu.CompilerParams(
            dimension_semantics=("parallel",),               # shard batch over TCs (v7x)
            vmem_limit_bytes=vmem_limit),
    )(x_in, w_in, b2)

    if b_pad != B:
        out = out[:B]
    return out


if __name__ == "__main__":
    key = jax.random.PRNGKey(0)
    kx, kw, kb, kx2 = jax.random.split(key, 4)

    D = 32                                   # GATE(dim=32)
    B = 8
    bound = 1.0 / jnp.sqrt(jnp.float32(D))
    weight = jax.random.uniform(kw, (D, D), jnp.float32, -bound, bound)
    bias = jax.random.uniform(kb, (D,), jnp.float32, -bound, bound)

    # Small-shape check (f32 operands, tight tolerance).
    x = jax.random.normal(kx, (B, D), dtype=jnp.float32)
    out = gate_forward(x, weight, bias)
    jax.block_until_ready(out)
    ref = jnp.dot(x, weight.T, precision=lax.Precision.HIGHEST) + bias
    assert out.shape == (B, D)
    assert jnp.allclose(out, ref, atol=1e-4, rtol=1e-4)

    # Larger ragged batch exercises the tiled/padded path: grid over the batch,
    # weight held resident in VMEM across all grid steps.
    B2 = 1030
    x2 = jax.random.normal(kx2, (B2, D), dtype=jnp.float32)
    out2 = gate_forward(x2, weight, bias)
    jax.block_until_ready(out2)
    ref2 = jnp.dot(x2, weight.T, precision=lax.Precision.HIGHEST) + bias
    assert out2.shape == (B2, D)
    assert jnp.allclose(out2, ref2, atol=1e-4, rtol=1e-4)

    # bf16 MXU operands (f32 accumulation) — looser tolerance.
    out_bf16 = gate_forward(x, weight, bias, compute_dtype=jnp.bfloat16)
    jax.block_until_ready(out_bf16)
    assert jnp.allclose(out_bf16, ref, atol=1e-1, rtol=1e-1)

    print("KERNEL_OK")
</pallas_src>

<mosaic_0001>
module attributes {stable_mosaic.version = 11 : i64} {
  func.func @gate_kernel(%arg0: i32, %arg1: memref<8x32xf32, #tpu.memory_space<vmem>>, %arg2: memref<32x32xf32, #tpu.memory_space<vmem>>, %arg3: memref<1x32xf32, #tpu.memory_space<vmem>>, %arg4: memref<8x32xf32, #tpu.memory_space<vmem>>) attributes {dimension_semantics = [#tpu.dimension_semantics<parallel>], iteration_bounds = array<i64: 1>, scalar_prefetch = 0 : i64, scratch_operands = 0 : i64, tpu.core_type = #tpu.core_type<tc>, window_params = [{transform_indices = @transform_0, window_bounds = array<i64: 8, 32>}, {pipeline_mode = #tpu.pipeline_mode<synchronous>, transform_indices = @transform_1, window_bounds = array<i64: 32, 32>}, {pipeline_mode = #tpu.pipeline_mode<synchronous>, transform_indices = @transform_2, window_bounds = array<i64: 1, 32>}, {transform_indices = @transform_3, window_bounds = array<i64: 8, 32>}]} {
    %c0 = arith.constant 0 : index
    %c0_0 = arith.constant 0 : index
    %0 = vector.load %arg1[%c0, %c0_0] : memref<8x32xf32, #tpu.memory_space<vmem>>, vector<8x32xf32>
    %c0_1 = arith.constant 0 : index
    %c0_2 = arith.constant 0 : index
    %1 = vector.load %arg2[%c0_1, %c0_2] : memref<32x32xf32, #tpu.memory_space<vmem>>, vector<32x32xf32>
    %cst = arith.constant dense<0.000000e+00> : vector<8x32xf32>
    %2 = tpu.matmul %0, %1, %cst {dimension_numbers = #tpu.dot_dimension_numbers<[1], [1], [0], [0], [0, 0, 1, 0], [], []>} : vector<8x32xf32>, vector<32x32xf32>, vector<8x32xf32> -> vector<8x32xf32>
    %c0_3 = arith.constant 0 : index
    %c0_4 = arith.constant 0 : index
    %3 = vector.load %arg3[%c0_3, %c0_4] : memref<1x32xf32, #tpu.memory_space<vmem>>, vector<1x32xf32>
    %4 = vector.broadcast %3 : vector<1x32xf32> to vector<8x32xf32>
    %5 = arith.addf %2, %4 : vector<8x32xf32>
    %c0_5 = arith.constant 0 : index
    %c0_6 = arith.constant 0 : index
    %6 = vector.load %arg4[%c0_5, %c0_6] : memref<8x32xf32, #tpu.memory_space<vmem>>, vector<8x32xf32>
    tpu.vector_store %arg4[%c0_5, %c0_6], %5 {strides = array<i32>} : memref<8x32xf32, #tpu.memory_space<vmem>>, vector<8x32xf32>,
    return
  }
  func.func @transform_0(%arg0: i32) -> (i32, i32) {
    %c0_i32 = arith.constant 0 : i32
    %c0_i32_0 = arith.constant 0 : i32
    return %arg0, %c0_i32 : i32, i32
  }
  func.func @transform_1(%arg0: i32) -> (i32, i32) {
    %c0_i32 = arith.constant 0 : i32
    %c0_i32_0 = arith.constant 0 : i32
    %c0_i32_1 = arith.constant 0 : i32
    return %c0_i32, %c0_i32_0 : i32, i32
  }
  func.func @transform_2(%arg0: i32) -> (i32, i32) {
    %c0_i32 = arith.constant 0 : i32
    %c0_i32_0 = arith.constant 0 : i32
    %c0_i32_1 = arith.constant 0 : i32
    return %c0_i32, %c0_i32_0 : i32, i32
  }
  func.func @transform_3(%arg0: i32) -> (i32, i32) {
    %c0_i32 = arith.constant 0 : i32
    %c0_i32_0 = arith.constant 0 : i32
    return %arg0, %c0_i32 : i32, i32
  }
}

</mosaic_0001>

<llo_original>
// kernel: tpu_custom_call.1
$region0: #{tpu_custom_call.1}
  #allocation0 [shape = 'u32[]', space=smem, size = 0x4, offset = 0x4, fixed_abs, tag = 'smem constant byte address 0x4 - core index']
  #allocation1 [shape = 'u32[144,128]{1,0:T(1,128)}', space=vmem, size = 0x12000, scoped, tag = 'internal scratch']
  %s0 = inlined_call_operand.hbm [shape: f32[8,32], index: 0, kind: input, shape index: {}]
  %s1 = inlined_call_operand.hbm [shape: f32[32,32], index: 1, kind: input, shape index: {}]
  %s2 = inlined_call_operand.vmem [shape: f32[1,32], index: 2, kind: input, shape index: {}]
  %s3 = inlined_call_operand.hbm [shape: f32[8,32], index: 3, kind: output, shape index: {}]
  %s4 = sld [smem:[#allocation0]]
  $region30: #{tpu_custom_call.1} parent=0
    _
  %s6 = ssub.s32 1, %s4
  %s7 = scalar_select 0, %s6, %s4
  $region1: #{tpu_custom_call.1} parent=0
    #allocation2 [shape = 'u8[4096]{0}', space=vmem, size = 0x1000, scoped, tag = 'input window, operand 0, single buffered']
    #allocation3 [shape = 's32[1]{0}', space=sflag, size = 0x4, scoped, tag = 'scoped memory for tpu_custom_call.1']
    #allocation4 [shape = 's32[1]{0}', space=sflag, size = 0x4, scoped, tag = 'scoped memory for tpu_custom_call.1']
    #allocation5 [shape = 'u8[16384]{0}', space=vmem, size = 0x4000, scoped, tag = 'input window, operand 1, single buffered']
    #allocation6 [shape = 's32[1]{0}', space=sflag, size = 0x4, scoped, tag = 'scoped memory for tpu_custom_call.1']
    #allocation7 [shape = 'u8[4096]{0}', space=vmem, size = 0x1000, scoped, tag = 'output window, operand 0, single buffered']
    %8 = vsyncpa [#allocation3], 0
    %9 = vsyncpa [#allocation6], 0
    %10 = vsyncpa [#allocation4], 0
    // Predicated region
    $region2: #{tpu_custom_call.1} parent=1 // pred_check
      _
    $region3: #{tpu_custom_call.1} parent=1 // pred_check_branch
      %12 = sbr.rel (0) target = $region5
    $region4: #{tpu_custom_call.1} parent=1 // pred_region
      %s14 = ssub.s32 128, 128
      %15 = vsyncadd [#allocation3], %s14
      %s17 = sshll.u32 [#allocation2], 4
      %s18 = int_to_ptr.vmem [resolvable:$true] %s17
      %20 = dma.hbm_to_vmem [thread:$0]  %s0, 128, %s18, [#allocation3]
    $region5: #{tpu_custom_call.1} parent=1 // pred_fallthru
      _
    // Predicated region
    $region6: #{tpu_custom_call.1} parent=1 // pred_check
      _
    $region7: #{tpu_custom_call.1} parent=1 // pred_check_branch
      %22 = sbr.rel (0) target = $region9
    $region8: #{tpu_custom_call.1} parent=1 // pred_region
      %s24 = ssub.s32 512, 512
      %25 = vsyncadd [#allocation6], %s24
      %s26 = sshll.u32 [#allocation5], 4
      %s27 = int_to_ptr.vmem [resolvable:$true] %s26
      %32 = dma.hbm_to_vmem [thread:$0]  %s1, 512, %s27, [#allocation6], 128, 128, 8
    $region9: #{tpu_custom_call.1} parent=1 // pred_fallthru
      _
    // Predicated region
    $region10: #{tpu_custom_call.1} parent=1 // pred_check
      _
    $region11: #{tpu_custom_call.1} parent=1 // pred_check_branch
      %34 = sbr.rel (0) target = $region13
    $region12: #{tpu_custom_call.1} parent=1 // pred_region
      _
    $region13: #{tpu_custom_call.1} parent=1 // pred_fallthru
      _
    // Predicated region
    $region14: #{tpu_custom_call.1} parent=1 // pred_check
      _
    $region15: #{tpu_custom_call.1} parent=1 // pred_check_branch
      %36 = sbr.rel (0) target = $region17
    $region16: #{tpu_custom_call.1} parent=1 // pred_region
      %37 = dma.done [#allocation3], 128
    $region17: #{tpu_custom_call.1} parent=1 // pred_fallthru
      _
    // Predicated region
    $region18: #{tpu_custom_call.1} parent=1 // pred_check
      _
    $region19: #{tpu_custom_call.1} parent=1 // pred_check_branch
      %39 = sbr.rel (0) target = $region21
    $region20: #{tpu_custom_call.1} parent=1 // pred_region
      %40 = dma.done [#allocation6], 512
    $region21: #{tpu_custom_call.1} parent=1 // pred_fallthru
      _
    %v41 = vld [vmem:[#allocation2] sm:$0xff]
    %v42 = vld [vmem:[#allocation5] sm:$0xff]
    %v43 = vld [vmem:[#allocation5 + $0x8] sm:$0xff]
    %v44 = vld [vmem:[#allocation5 + $0x10] sm:$0xff]
    %v45 = vld [vmem:[#allocation5 + $0x18] sm:$0xff]
    %v46 = vld [vmem:[%s2] sm:$0x1]
    %v48 = vlaneseq
    %v49 = vshrl.u32 %v48, 7
    %v50 = vsub.s32 0, %v49
    %v51 = vrot.slane %v46, %v50
    %vm53 = vcmask 261120
    %v55 = vsel %vm53, %v41, 0
    %v58 = vsel %vm53, %v42, 0
    %v61 = vsel %vm53, %v43, 0
    %v64 = vsel %vm53, %v44, 0
    %v67 = vsel %vm53, %v45, 0
    %69 = vmatprep.subr.mxu0 0.0
    %70 = vmatpush1.xpose.msra.mxu0 %v58
    %71 = vmatprep.subr.mxu0 0.0
    %72 = vmatpush1.xpose.msra.mxu0 %v61
    %73 = vmatprep.subr.mxu0 0.0
    %74 = vmatpush1.xpose.msra.mxu0 %v64
    %75 = vmatprep.subr.mxu0 0.0
    %76 = vmatpush1.xpose.msra.mxu0 %v67
    %77 = vmatprep.subr.mxu0 0.0
    %78 = vmatpush1.xpose.msra.mxu0 0.0
    %79 = vmatprep.subr.mxu0 0.0
    %80 = vmatpush1.xpose.msra.mxu0 0.0
    %81 = vmatprep.subr.mxu0 0.0
    %82 = vmatpush1.xpose.msra.mxu0 0.0
    %83 = vmatprep.subr.mxu0 0.0
    %84 = vmatpush1.xpose.msra.mxu0 0.0
    %85 = vmatprep.subr.mxu0 0.0
    %86 = vmatpush1.xpose.msra.mxu0 0.0
    %87 = vmatprep.subr.mxu0 0.0
    %88 = vmatpush1.xpose.msra.mxu0 0.0
    %89 = vmatprep.subr.mxu0 0.0
    %90 = vmatpush1.xpose.msra.mxu0 0.0
    %91 = vmatprep.subr.mxu0 0.0
    %92 = vmatpush1.xpose.msra.mxu0 0.0
    %93 = vmatprep.subr.mxu0 0.0
    %94 = vmatpush1.xpose.msra.mxu0 0.0
    %95 = vmatprep.subr.mxu0 0.0
    %96 = vmatpush1.xpose.msra.mxu0 0.0
    %97 = vmatprep.subr.mxu0 0.0
    %98 = vmatpush1.xpose.msra.mxu0 0.0
    %99 = vmatprep.subr.mxu0 0.0
    %100 = vmatpush1.xpose.msra.mxu0 0.0
    %101 = vmatprep.subr.mxu0 0.0
    %102 = vmatpush1.xpose.msra.mxu0 0.0
    %103 = vmatprep.subr.mxu0 0.0
    %104 = vmatpush1.xpose.msra.mxu0 0.0
    %105 = vmatprep.subr.mxu0 0.0
    %106 = vmatpush1.xpose.msra.mxu0 0.0
    %107 = vmatprep.subr.mxu0 0.0
    %108 = vmatpush1.xpose.msra.mxu0 0.0
    %109 = vmatprep.subr.mxu0 0.0
    %110 = vmatpush1.xpose.msra.mxu0 0.0
    %111 = vmatprep.subr.mxu0 0.0
    %112 = vmatpush1.xpose.msra.mxu0 0.0
    %113 = vmatprep.subr.mxu0 0.0
    %114 = vmatpush1.xpose.msra.mxu0 0.0
    %115 = vmatprep.subr.mxu0 0.0
    %116 = vmatpush1.xpose.msra.mxu0 0.0
    %117 = vmatprep.subr.mxu0 0.0
    %118 = vmatpush1.xpose.msra.mxu0 0.0
    %119 = vmatprep.subr.mxu0 0.0
    %120 = vmatpush1.xpose.msra.mxu0 0.0
    %121 = vmatprep.subr.mxu0 0.0
    %122 = vmatpush1.xpose.msra.mxu0 0.0
    %123 = vmatprep.subr.mxu0 0.0
    %124 = vmatpush1.xpose.msra.mxu0 0.0
    %125 = vmatprep.subr.mxu0 0.0
    %126 = vmatpush1.xpose.msra.mxu0 0.0
    %127 = vmatprep.subr.mxu0 0.0
    %128 = vmatpush1.xpose.msra.mxu0 0.0
    %129 = vmatprep.subr.mxu0 0.0
    %130 = vmatpush1.xpose.msra.mxu0 0.0
    %131 = vmatprep.subr.mxu0 0.0
    %132 = vmatpush1.xpose.msra.mxu0 0.0
    %133 = vmatprep.mubr.f32.mxu0 0.0
    %134 = vmatmul.mubr.f32.gmra.mrb[0].mxu0 %v55
    %v135 = vpop.f32.mrb[0].mxu0
    %v136 = vadd.f32 %v51, %v135
    %v137 = vpop.f32.mrb[0].mxu0
    %138 = vdwg.mxu0
    %139 = vst.msk [vmem:[#allocation7] sm:$0xff] %vm53, %v136
    // Predicated region
    $region22: #{tpu_custom_call.1} parent=1 // pred_check
      _
    $region23: #{tpu_custom_call.1} parent=1 // pred_check_branch
      %141 = sbr.rel (0) target = $region25
    $region24: #{tpu_custom_call.1} parent=1 // pred_region
      %s143 = ssub.s32 128, 128
      %144 = vsyncadd [#allocation4], %s143
      %s146 = sshll.u32 [#allocation7], 4
      %s147 = int_to_ptr.vmem [resolvable:$true] %s146
      %149 = dma.vmem_to_hbm [thread:$0]  %s147, 128, %s3, [#allocation4]
    $region25: #{tpu_custom_call.1} parent=1 // pred_fallthru
      _
    // Predicated region
    $region26: #{tpu_custom_call.1} parent=1 // pred_check
      _
    $region27: #{tpu_custom_call.1} parent=1 // pred_check_branch
      %151 = sbr.rel (0) target = $region29
    $region28: #{tpu_custom_call.1} parent=1 // pred_region
      %152 = dma.done [#allocation4], 128
    $region29: #{tpu_custom_call.1} parent=1 // pred_fallthru
      _
    %153 = vsyncpa [#allocation3], 1
    %154 = vsyncpa [#allocation6], 1
    %155 = vsyncpa [#allocation4], 1

</llo_original>
